<compile_context>
chip_gen: v7x
topology: tpu7x:2x2x1
jax: 0.10.0
libtpu: 0.0.40
codegen_flags: <defaults>
</compile_context>

<pallas_src>
import functools

import jax
import jax.numpy as jnp
from jax.experimental import pallas as pl
from jax.experimental.pallas import tpu as pltpu


def _round_up(x, m):
    return ((x + m - 1) // m) * m


_OP = 128                              # lane-dense padded classifier width
_VMEM_TABLE_BUDGET = 4 * 1024 * 1024   # table bytes below which it lives in VMEM
                                       # (double-buffered; safe under the default
                                       # scoped VMEM limit on v5e/v6e/v7x)


def _pick_batch_tile(batch):
    """Batch rows per grid step: big enough to amortize per-step overhead and
    fill MXU rows, small enough that v7x's two TensorCores both get a
    'parallel' grid tile when the batch allows it."""
    b8 = _round_up(batch, 8)
    tb = min(64, b8)
    if b8 // tb < 2 <= b8 // 8:        # prefer >= 2 parallel tiles (v7x megacore)
        tb = max(8, _round_up(b8 // 2, 8))
    return tb


# ---------------------------------------------------------------------------
# Path 1: VMEM-resident table (small / medium vocab) -- bag-of-words on the MXU.
# ---------------------------------------------------------------------------
def _fasttext_vmem_kernel(ids_ref, emb_ref, w_ref, b_ref, out_ref):
    """Grid: (B_pad // TB,), one batch tile per step ("parallel").

    ids_ref : (TB, S)        int32 token ids for this batch tile (VMEM)
    emb_ref : (V_pad, E_pad) zero-padded embedding table, fully VMEM-resident
    w_ref   : (E_pad, 128)   classifier weight^T, zero-padded to 128 lanes
    b_ref   : (1, 128)       bias, zero-padded
    out_ref : (TB, 128)      padded logits for this tile
    """
    TB, S = ids_ref.shape
    V_pad = emb_ref.shape[0]

    ids = ids_ref[...]                                            # (TB, S)
    viota = jax.lax.broadcasted_iota(jnp.int32, (TB, V_pad), 1)   # vocab lane iota

    # Bag-of-words counts: counts[r, v] = #{s : ids[r, s] == v}.  One compare+add
    # over a (TB, V_pad) tile per token; replaces per-token DMA gather + scatter.
    counts = jnp.zeros((TB, V_pad), jnp.int32)
    for s in range(S):          # S is a trace-time constant; short static unroll
        counts = counts + (viota == ids[:, s:s + 1]).astype(jnp.int32)

    bow = counts.astype(jnp.float32) * (1.0 / float(S))           # mean weights
    # mean_over_seq(Embedding(ids)) == bow @ table  (identical up to fp order).
    emb_mean = jnp.dot(bow, emb_ref[...].astype(jnp.float32),
                       preferred_element_type=jnp.float32)        # (TB, E_pad)
    logits = jnp.dot(emb_mean, w_ref[...].astype(jnp.float32),
                     preferred_element_type=jnp.float32)          # (TB, 128)
    out_ref[...] = (logits + b_ref[...].astype(jnp.float32)).astype(out_ref.dtype)


# ---------------------------------------------------------------------------
# Path 2: HBM table + manual DMA gather (fallback for large vocabularies).
# ---------------------------------------------------------------------------
def _fasttext_gather_kernel(ids_ref, emb_hbm, w_ref, b_ref, out_ref,
                            row_buf, sem, mean_ref, *, valid_b):
    """Grid: (B_pad // TB,).

    ids_ref  : (B_pad*S,) int32 flattened ids in SMEM (scalar prefetch;
               flat so SMEM is not padded out to 128 columns)
    emb_hbm  : (V, E)     embedding table left in HBM (pl.ANY)
    row_buf  : (2, S, E)  double-buffered fan-out of one batch row's embeddings
    sem      : (2, S)     one DMA semaphore per outstanding token copy
    mean_ref : (TB, E)    per-row mean embeddings (f32)
    """
    TB = out_ref.shape[0]
    S = row_buf.shape[1]
    b0 = pl.program_id(0) * TB
    inv_s = 1.0 / float(S)

    def row_copy(base, slot, s):
        # The SAME descriptor (same src slice, same dst slice, same semaphore)
        # is used for .start() and .wait() -- no mismatched-source wait.
        tok = ids_ref[base + s]
        return pltpu.make_async_copy(
            emb_hbm.at[pl.ds(tok, 1), :],
            row_buf.at[slot, pl.ds(s, 1), :],
            sem.at[slot, s],
        )

    def fetch_row(r, slot):
        @pl.when(b0 + r < valid_b)          # skip DMAs for padded batch rows
        def _():
            base = (b0 + r) * S             # one multiply per row; no per-token div
            @pl.loop(0, S)                  # fan out the whole sequence at once
            def _(s):
                row_copy(base, slot, s).start()

    def wait_row(r, slot):
        @pl.when(b0 + r < valid_b)
        def _():
            base = (b0 + r) * S
            @pl.loop(0, S)
            def _(s):
                row_copy(base, slot, s).wait()

    fetch_row(0, 0)
    for r in range(TB):                     # TB is small here; static unroll
        slot = r & 1
        # Prefetch-then-wait: the next row's S copies are in flight while we
        # block on the current row's semaphores.
        if r + 1 < TB:
            fetch_row(r + 1, (r + 1) & 1)
        wait_row(r, slot)
        # Per-row accumulation: one (S,E)->(1,E) reduction, no broadcast select.
        # (Padded rows write don't-care values that the wrapper slices away.)
        row_sum = jnp.sum(row_buf[slot].astype(jnp.float32), axis=0, keepdims=True)
        mean_ref[r:r + 1, :] = row_sum * inv_s

    logits = jnp.dot(mean_ref[...], w_ref[...].astype(jnp.float32),
                     preferred_element_type=jnp.float32)
    out_ref[...] = (logits + b_ref[...].astype(jnp.float32)).astype(out_ref.dtype)


# ---------------------------------------------------------------------------
# Wrapper
# ---------------------------------------------------------------------------
def fasttext_forward(inputs, emb_table, weight, bias):
    """logits = mean_over_seq(Embedding(inputs)) @ weight.T + bias.

    inputs: (B, S) int token ids -> (B, O) float32 logits.
    emb_table may be float32 or bfloat16 (accumulation stays f32 in-kernel).
    """
    B, S = inputs.shape
    V, E = emb_table.shape
    O = weight.shape[0]

    table_bytes = _round_up(V, 128) * _round_up(E, 128) * emb_table.dtype.itemsize
    use_vmem_table = table_bytes <= _VMEM_TABLE_BUDGET

    TB = _pick_batch_tile(B) if use_vmem_table else min(_pick_batch_tile(B), 16)
    B_pad = _round_up(B, TB)
    grid = (B_pad // TB,)

    # Pad batch ids with token 0 (a valid row); padded logits are sliced away.
    ids = jnp.zeros((B_pad, S), jnp.int32).at[:B].set(inputs.astype(jnp.int32))
    b_padded = jnp.zeros((1, _OP), jnp.float32).at[0, :O].set(bias.astype(jnp.float32))

    if use_vmem_table:
        # ---- VMEM-resident table: (counts/S) @ table @ W^T on the MXU ----
        V_pad = _round_up(V, 128)
        E_pad = _round_up(E, 128)
        emb_pad = jnp.zeros((V_pad, E_pad), emb_table.dtype).at[:V, :E].set(emb_table)
        w_pad = (jnp.zeros((E_pad, _OP), jnp.float32)
                 .at[:E, :O].set(weight.T.astype(jnp.float32)))

        # Note: table/W/bias have constant index_maps so they are not re-copied
        # across grid steps; pl.Buffered(1) single-buffering is omitted for
        # compatibility (the double-buffer cost here is a few hundred KiB).
        out = pl.pallas_call(
            _fasttext_vmem_kernel,
            out_shape=jax.ShapeDtypeStruct((B_pad, _OP), jnp.float32),
            grid_spec=pltpu.PrefetchScalarGridSpec(
                num_scalar_prefetch=0,
                grid=grid,
                in_specs=[
                    pl.BlockSpec((TB, S), lambda i: (i, 0)),          # ids tile
                    pl.BlockSpec((V_pad, E_pad), lambda i: (0, 0)),   # full table
                    pl.BlockSpec((E_pad, _OP), lambda i: (0, 0)),     # W^T padded
                    pl.BlockSpec((1, _OP), lambda i: (0, 0)),         # bias padded
                ],
                out_specs=pl.BlockSpec((TB, _OP), lambda i: (i, 0)),
            ),
            compiler_params=pltpu.CompilerParams(
                dimension_semantics=("parallel",),
            ),
        )(ids, emb_pad, w_pad, b_padded)
    else:
        # ---- HBM table + row-fan-out DMA gather (large vocab fallback) ----
        # TODO(synk): for very long sequences, chunk the (S, E) fan-out buffer.
        w_pad = (jnp.zeros((E, _OP), jnp.float32)
                 .at[:, :O].set(weight.T.astype(jnp.float32)))
        kernel = functools.partial(_fasttext_gather_kernel, valid_b=B)

        out = pl.pallas_call(
            kernel,
            out_shape=jax.ShapeDtypeStruct((B_pad, _OP), jnp.float32),
            grid_spec=pltpu.PrefetchScalarGridSpec(
                num_scalar_prefetch=1,                                # ids -> SMEM
                grid=grid,
                in_specs=[
                    pl.BlockSpec(memory_space=pl.ANY),                # HBM table
                    pl.BlockSpec((E, _OP), lambda i, ids: (0, 0)),    # W^T padded
                    pl.BlockSpec((1, _OP), lambda i, ids: (0, 0)),    # bias padded
                ],
                out_specs=pl.BlockSpec((TB, _OP), lambda i, ids: (i, 0)),
                scratch_shapes=[
                    pltpu.VMEM((2, S, E), emb_table.dtype),   # row fan-out buffers
                    pltpu.SemaphoreType.DMA((2, S)),          # per-copy semaphores
                    pltpu.VMEM((TB, E), jnp.float32),         # per-row means
                ],
            ),
            compiler_params=pltpu.CompilerParams(
                dimension_semantics=("parallel",),
            ),
        )(ids.reshape(B_pad * S), emb_table, w_pad, b_padded)

    return out[:B, :O]


if __name__ == "__main__":
    # Small shapes consistent with the module (default embedding_size=512, 5 classes).
    VOCAB, EMBED, OUT = 100, 512, 5
    B, S = 2, 16

    key = jax.random.PRNGKey(0)
    k_ids, k_emb, k_w, k_b = jax.random.split(key, 4)

    inputs = jax.random.randint(k_ids, (B, S), 0, VOCAB, dtype=jnp.int32)
    emb_table = jax.random.normal(k_emb, (VOCAB, EMBED), dtype=jnp.float32)
    weight = jax.random.normal(k_w, (OUT, EMBED), dtype=jnp.float32) * 0.02
    bias = jax.random.normal(k_b, (OUT,), dtype=jnp.float32) * 0.01

    out = fasttext_forward(inputs, emb_table, weight, bias)
    out = jax.block_until_ready(out)

    # Pure-JAX reference for correctness (tolerance covers MXU bf16-pass rounding).
    ref = jnp.mean(jnp.take(emb_table, inputs, axis=0), axis=1) @ weight.T + bias
    assert out.shape == (B, OUT)
    assert jnp.allclose(out, ref, atol=2e-3, rtol=2e-3), "mismatch vs reference"

    print("KERNEL_OK")
</pallas_src>

<mosaic_0001>
module attributes {stable_mosaic.version = 11 : i64} {
  func.func @_fasttext_vmem_kernel(%arg0: i32, %arg1: memref<8x16xi32, #tpu.memory_space<vmem>>, %arg2: memref<128x512xf32, #tpu.memory_space<vmem>>, %arg3: memref<512x128xf32, #tpu.memory_space<vmem>>, %arg4: memref<1x128xf32, #tpu.memory_space<vmem>>, %arg5: memref<8x128xf32, #tpu.memory_space<vmem>>) attributes {dimension_semantics = [#tpu.dimension_semantics<parallel>], iteration_bounds = array<i64: 1>, scalar_prefetch = 0 : i64, scratch_operands = 0 : i64, tpu.core_type = #tpu.core_type<tc>, window_params = [{transform_indices = @transform_0, window_bounds = array<i64: 8, 16>}, {pipeline_mode = #tpu.pipeline_mode<synchronous>, transform_indices = @transform_1, window_bounds = array<i64: 128, 512>}, {pipeline_mode = #tpu.pipeline_mode<synchronous>, transform_indices = @transform_2, window_bounds = array<i64: 512, 128>}, {pipeline_mode = #tpu.pipeline_mode<synchronous>, transform_indices = @transform_3, window_bounds = array<i64: 1, 128>}, {transform_indices = @transform_4, window_bounds = array<i64: 8, 128>}]} {
    %c0 = arith.constant 0 : index
    %c0_0 = arith.constant 0 : index
    %0 = vector.load %arg1[%c0, %c0_0] : memref<8x16xi32, #tpu.memory_space<vmem>>, vector<8x16xi32>
    %1 = tpu.iota {dimensions = array<i32: 1>} : vector<8x128xi32>
    %c0_i32 = arith.constant 0 : i32
    %2 = vector.broadcast %c0_i32 : i32 to vector<8x128xi32>
    %3 = vector.extract_strided_slice %0 {offsets = [0, 0], sizes = [8, 1], strides = [1, 1]} : vector<8x16xi32> to vector<8x1xi32>
    %4 = vector.broadcast %3 : vector<8x1xi32> to vector<8x128xi32>
    %5 = arith.cmpi eq, %1, %4 : vector<8x128xi32>
    %6 = arith.extui %5 : vector<8x128xi1> to vector<8x128xi32>
    %7 = arith.addi %2, %6 : vector<8x128xi32>
    %8 = vector.extract_strided_slice %0 {offsets = [0, 1], sizes = [8, 1], strides = [1, 1]} : vector<8x16xi32> to vector<8x1xi32>
    %9 = vector.broadcast %8 : vector<8x1xi32> to vector<8x128xi32>
    %10 = arith.cmpi eq, %1, %9 : vector<8x128xi32>
    %11 = arith.extui %10 : vector<8x128xi1> to vector<8x128xi32>
    %12 = arith.addi %7, %11 : vector<8x128xi32>
    %13 = vector.extract_strided_slice %0 {offsets = [0, 2], sizes = [8, 1], strides = [1, 1]} : vector<8x16xi32> to vector<8x1xi32>
    %14 = vector.broadcast %13 : vector<8x1xi32> to vector<8x128xi32>
    %15 = arith.cmpi eq, %1, %14 : vector<8x128xi32>
    %16 = arith.extui %15 : vector<8x128xi1> to vector<8x128xi32>
    %17 = arith.addi %12, %16 : vector<8x128xi32>
    %18 = vector.extract_strided_slice %0 {offsets = [0, 3], sizes = [8, 1], strides = [1, 1]} : vector<8x16xi32> to vector<8x1xi32>
    %19 = vector.broadcast %18 : vector<8x1xi32> to vector<8x128xi32>
    %20 = arith.cmpi eq, %1, %19 : vector<8x128xi32>
    %21 = arith.extui %20 : vector<8x128xi1> to vector<8x128xi32>
    %22 = arith.addi %17, %21 : vector<8x128xi32>
    %23 = vector.extract_strided_slice %0 {offsets = [0, 4], sizes = [8, 1], strides = [1, 1]} : vector<8x16xi32> to vector<8x1xi32>
    %24 = vector.broadcast %23 : vector<8x1xi32> to vector<8x128xi32>
    %25 = arith.cmpi eq, %1, %24 : vector<8x128xi32>
    %26 = arith.extui %25 : vector<8x128xi1> to vector<8x128xi32>
    %27 = arith.addi %22, %26 : vector<8x128xi32>
    %28 = vector.extract_strided_slice %0 {offsets = [0, 5], sizes = [8, 1], strides = [1, 1]} : vector<8x16xi32> to vector<8x1xi32>
    %29 = vector.broadcast %28 : vector<8x1xi32> to vector<8x128xi32>
    %30 = arith.cmpi eq, %1, %29 : vector<8x128xi32>
    %31 = arith.extui %30 : vector<8x128xi1> to vector<8x128xi32>
    %32 = arith.addi %27, %31 : vector<8x128xi32>
    %33 = vector.extract_strided_slice %0 {offsets = [0, 6], sizes = [8, 1], strides = [1, 1]} : vector<8x16xi32> to vector<8x1xi32>
    %34 = vector.broadcast %33 : vector<8x1xi32> to vector<8x128xi32>
    %35 = arith.cmpi eq, %1, %34 : vector<8x128xi32>
    %36 = arith.extui %35 : vector<8x128xi1> to vector<8x128xi32>
    %37 = arith.addi %32, %36 : vector<8x128xi32>
    %38 = vector.extract_strided_slice %0 {offsets = [0, 7], sizes = [8, 1], strides = [1, 1]} : vector<8x16xi32> to vector<8x1xi32>
    %39 = vector.broadcast %38 : vector<8x1xi32> to vector<8x128xi32>
    %40 = arith.cmpi eq, %1, %39 : vector<8x128xi32>
    %41 = arith.extui %40 : vector<8x128xi1> to vector<8x128xi32>
    %42 = arith.addi %37, %41 : vector<8x128xi32>
    %43 = vector.extract_strided_slice %0 {offsets = [0, 8], sizes = [8, 1], strides = [1, 1]} : vector<8x16xi32> to vector<8x1xi32>
    %44 = vector.broadcast %43 : vector<8x1xi32> to vector<8x128xi32>
    %45 = arith.cmpi eq, %1, %44 : vector<8x128xi32>
    %46 = arith.extui %45 : vector<8x128xi1> to vector<8x128xi32>
    %47 = arith.addi %42, %46 : vector<8x128xi32>
    %48 = vector.extract_strided_slice %0 {offsets = [0, 9], sizes = [8, 1], strides = [1, 1]} : vector<8x16xi32> to vector<8x1xi32>
    %49 = vector.broadcast %48 : vector<8x1xi32> to vector<8x128xi32>
    %50 = arith.cmpi eq, %1, %49 : vector<8x128xi32>
    %51 = arith.extui %50 : vector<8x128xi1> to vector<8x128xi32>
    %52 = arith.addi %47, %51 : vector<8x128xi32>
    %53 = vector.extract_strided_slice %0 {offsets = [0, 10], sizes = [8, 1], strides = [1, 1]} : vector<8x16xi32> to vector<8x1xi32>
    %54 = vector.broadcast %53 : vector<8x1xi32> to vector<8x128xi32>
    %55 = arith.cmpi eq, %1, %54 : vector<8x128xi32>
    %56 = arith.extui %55 : vector<8x128xi1> to vector<8x128xi32>
    %57 = arith.addi %52, %56 : vector<8x128xi32>
    %58 = vector.extract_strided_slice %0 {offsets = [0, 11], sizes = [8, 1], strides = [1, 1]} : vector<8x16xi32> to vector<8x1xi32>
    %59 = vector.broadcast %58 : vector<8x1xi32> to vector<8x128xi32>
    %60 = arith.cmpi eq, %1, %59 : vector<8x128xi32>
    %61 = arith.extui %60 : vector<8x128xi1> to vector<8x128xi32>
    %62 = arith.addi %57, %61 : vector<8x128xi32>
    %63 = vector.extract_strided_slice %0 {offsets = [0, 12], sizes = [8, 1], strides = [1, 1]} : vector<8x16xi32> to vector<8x1xi32>
    %64 = vector.broadcast %63 : vector<8x1xi32> to vector<8x128xi32>
    %65 = arith.cmpi eq, %1, %64 : vector<8x128xi32>
    %66 = arith.extui %65 : vector<8x128xi1> to vector<8x128xi32>
    %67 = arith.addi %62, %66 : vector<8x128xi32>
    %68 = vector.extract_strided_slice %0 {offsets = [0, 13], sizes = [8, 1], strides = [1, 1]} : vector<8x16xi32> to vector<8x1xi32>
    %69 = vector.broadcast %68 : vector<8x1xi32> to vector<8x128xi32>
    %70 = arith.cmpi eq, %1, %69 : vector<8x128xi32>
    %71 = arith.extui %70 : vector<8x128xi1> to vector<8x128xi32>
    %72 = arith.addi %67, %71 : vector<8x128xi32>
    %73 = vector.extract_strided_slice %0 {offsets = [0, 14], sizes = [8, 1], strides = [1, 1]} : vector<8x16xi32> to vector<8x1xi32>
    %74 = vector.broadcast %73 : vector<8x1xi32> to vector<8x128xi32>
    %75 = arith.cmpi eq, %1, %74 : vector<8x128xi32>
    %76 = arith.extui %75 : vector<8x128xi1> to vector<8x128xi32>
    %77 = arith.addi %72, %76 : vector<8x128xi32>
    %78 = vector.extract_strided_slice %0 {offsets = [0, 15], sizes = [8, 1], strides = [1, 1]} : vector<8x16xi32> to vector<8x1xi32>
    %79 = vector.broadcast %78 : vector<8x1xi32> to vector<8x128xi32>
    %80 = arith.cmpi eq, %1, %79 : vector<8x128xi32>
    %81 = arith.extui %80 : vector<8x128xi1> to vector<8x128xi32>
    %82 = arith.addi %77, %81 : vector<8x128xi32>
    %83 = arith.sitofp %82 : vector<8x128xi32> to vector<8x128xf32>
    %cst = arith.constant 6.250000e-02 : f32
    %84 = vector.broadcast %cst : f32 to vector<8x128xf32>
    %85 = arith.mulf %83, %84 : vector<8x128xf32>
    %c0_1 = arith.constant 0 : index
    %c0_2 = arith.constant 0 : index
    %86 = vector.load %arg2[%c0_1, %c0_2] : memref<128x512xf32, #tpu.memory_space<vmem>>, vector<128x512xf32>
    %cst_3 = arith.constant dense<0.000000e+00> : vector<8x512xf32>
    %87 = tpu.matmul %85, %86, %cst_3 {dimension_numbers = #tpu.dot_dimension_numbers<[1], [0], [0], [1], [0, 0, 1, 1], [], []>} : vector<8x128xf32>, vector<128x512xf32>, vector<8x512xf32> -> vector<8x512xf32>
    %c0_4 = arith.constant 0 : index
    %c0_5 = arith.constant 0 : index
    %88 = vector.load %arg3[%c0_4, %c0_5] : memref<512x128xf32, #tpu.memory_space<vmem>>, vector<512x128xf32>
    %cst_6 = arith.constant dense<0.000000e+00> : vector<8x128xf32>
    %89 = tpu.matmul %87, %88, %cst_6 {dimension_numbers = #tpu.dot_dimension_numbers<[1], [0], [0], [1], [0, 0, 1, 1], [], []>} : vector<8x512xf32>, vector<512x128xf32>, vector<8x128xf32> -> vector<8x128xf32>
    %c0_7 = arith.constant 0 : index
    %c0_8 = arith.constant 0 : index
    %90 = vector.load %arg4[%c0_7, %c0_8] : memref<1x128xf32, #tpu.memory_space<vmem>>, vector<1x128xf32>
    %91 = vector.broadcast %90 : vector<1x128xf32> to vector<8x128xf32>
    %92 = arith.addf %89, %91 : vector<8x128xf32>
    %c0_9 = arith.constant 0 : index
    %c0_10 = arith.constant 0 : index
    %93 = vector.load %arg5[%c0_9, %c0_10] : memref<8x128xf32, #tpu.memory_space<vmem>>, vector<8x128xf32>
    tpu.vector_store %arg5[%c0_9, %c0_10], %92 {strides = array<i32>} : memref<8x128xf32, #tpu.memory_space<vmem>>, vector<8x128xf32>,
    return
  }
  func.func @transform_0(%arg0: i32) -> (i32, i32) {
    %c0_i32 = arith.constant 0 : i32
    %c0_i32_0 = arith.constant 0 : i32
    return %arg0, %c0_i32 : i32, i32
  }
  func.func @transform_1(%arg0: i32) -> (i32, i32) {
    %c0_i32 = arith.constant 0 : i32
    %c0_i32_0 = arith.constant 0 : i32
    %c0_i32_1 = arith.constant 0 : i32
    return %c0_i32, %c0_i32_0 : i32, i32
  }
  func.func @transform_2(%arg0: i32) -> (i32, i32) {
    %c0_i32 = arith.constant 0 : i32
    %c0_i32_0 = arith.constant 0 : i32
    %c0_i32_1 = arith.constant 0 : i32
    return %c0_i32, %c0_i32_0 : i32, i32
  }
  func.func @transform_3(%arg0: i32) -> (i32, i32) {
    %c0_i32 = arith.constant 0 : i32
    %c0_i32_0 = arith.constant 0 : i32
    %c0_i32_1 = arith.constant 0 : i32
    return %c0_i32, %c0_i32_0 : i32, i32
  }
  func.func @transform_4(%arg0: i32) -> (i32, i32) {
    %c0_i32 = arith.constant 0 : i32
    %c0_i32_0 = arith.constant 0 : i32
    return %arg0, %c0_i32 : i32, i32
  }
}

</mosaic_0001>

<llo_original>
// kernel: tpu_custom_call.1
$region0: #{tpu_custom_call.1}
  #allocation0 [shape = 'u32[]', space=smem, size = 0x4, offset = 0x4, fixed_abs, tag = 'smem constant byte address 0x4 - core index']
  #allocation1 [shape = 'u32[144,128]{1,0:T(1,128)}', space=vmem, size = 0x12000, scoped, tag = 'internal scratch']
  %s0 = inlined_call_operand.hbm [shape: s32[8,16], index: 0, kind: input, shape index: {}]
  %s1 = inlined_call_operand.hbm [shape: f32[128,512], index: 1, kind: input, shape index: {}]
  %s2 = inlined_call_operand.hbm [shape: f32[512,128], index: 2, kind: input, shape index: {}]
  %s3 = inlined_call_operand.vmem [shape: f32[1,128], index: 3, kind: input, shape index: {}]
  %s4 = inlined_call_operand.hbm [shape: f32[8,128], index: 4, kind: output, shape index: {}]
  %s5 = sld [smem:[#allocation0]]
  $region38: #{tpu_custom_call.1} parent=0
    _
  %s7 = ssub.s32 1, %s5
  %s8 = scalar_select 0, %s7, %s5
  $region1: #{tpu_custom_call.1} parent=0
    #allocation2 [shape = 'u8[4096]{0}', space=vmem, size = 0x1000, scoped, tag = 'input window, operand 0, single buffered']
    #allocation3 [shape = 's32[1]{0}', space=sflag, size = 0x4, scoped, tag = 'scoped memory for tpu_custom_call.1']
    #allocation4 [shape = 's32[1]{0}', space=sflag, size = 0x4, scoped, tag = 'scoped memory for tpu_custom_call.1']
    #allocation5 [shape = 'u8[262144]{0}', space=vmem, size = 0x40000, scoped, tag = 'input window, operand 1, single buffered']
    #allocation6 [shape = 's32[1]{0}', space=sflag, size = 0x4, scoped, tag = 'scoped memory for tpu_custom_call.1']
    #allocation7 [shape = 'u8[262144]{0}', space=vmem, size = 0x40000, scoped, tag = 'input window, operand 2, single buffered']
    #allocation8 [shape = 'u8[4096]{0}', space=vmem, size = 0x1000, scoped, tag = 'output window, operand 0, single buffered']
    %9 = vsyncpa [#allocation3], 0
    %10 = vsyncpa [#allocation6], 0
    %11 = vsyncpa [#allocation4], 0
    // Predicated region
    $region2: #{tpu_custom_call.1} parent=1 // pred_check
      _
    $region3: #{tpu_custom_call.1} parent=1 // pred_check_branch
      %13 = sbr.rel (0) target = $region5
    $region4: #{tpu_custom_call.1} parent=1 // pred_region
      %s15 = ssub.s32 128, 128
      %16 = vsyncadd [#allocation3], %s15
      %s18 = sshll.u32 [#allocation2], 4
      %s19 = int_to_ptr.vmem [resolvable:$true] %s18
      %21 = dma.hbm_to_vmem [thread:$0]  %s0, 128, %s19, [#allocation3]
    $region5: #{tpu_custom_call.1} parent=1 // pred_fallthru
      _
    // Predicated region
    $region6: #{tpu_custom_call.1} parent=1 // pred_check
      _
    $region7: #{tpu_custom_call.1} parent=1 // pred_check_branch
      %23 = sbr.rel (0) target = $region9
    $region8: #{tpu_custom_call.1} parent=1 // pred_region
      %s25 = ssub.s32 8192, 8192
      %26 = vsyncadd [#allocation6], %s25
      %s27 = sshll.u32 [#allocation5], 4
      %s28 = int_to_ptr.vmem [resolvable:$true] %s27
      %33 = dma.hbm_to_vmem [thread:$0]  %s1, 8192, %s28, [#allocation6], 512, 512, 32
    $region9: #{tpu_custom_call.1} parent=1 // pred_fallthru
      _
    // Predicated region
    $region10: #{tpu_custom_call.1} parent=1 // pred_check
      _
    $region11: #{tpu_custom_call.1} parent=1 // pred_check_branch
      %35 = sbr.rel (0) target = $region13
    $region12: #{tpu_custom_call.1} parent=1 // pred_region
      %s37 = ssub.s32 8192, 8192
      %38 = vsyncadd [#allocation6], %s37
      %s39 = sshll.u32 [#allocation7], 4
      %s40 = int_to_ptr.vmem [resolvable:$true] %s39
      %45 = dma.hbm_to_vmem [thread:$0]  %s2, 8192, %s40, [#allocation6], 128, 128, 8
    $region13: #{tpu_custom_call.1} parent=1 // pred_fallthru
      _
    // Predicated region
    $region14: #{tpu_custom_call.1} parent=1 // pred_check
      _
    $region15: #{tpu_custom_call.1} parent=1 // pred_check_branch
      %47 = sbr.rel (0) target = $region17
    $region16: #{tpu_custom_call.1} parent=1 // pred_region
      _
    $region17: #{tpu_custom_call.1} parent=1 // pred_fallthru
      _
    // Predicated region
    $region18: #{tpu_custom_call.1} parent=1 // pred_check
      _
    $region19: #{tpu_custom_call.1} parent=1 // pred_check_branch
      %49 = sbr.rel (0) target = $region21
    $region20: #{tpu_custom_call.1} parent=1 // pred_region
      %50 = dma.done [#allocation3], 128
    $region21: #{tpu_custom_call.1} parent=1 // pred_fallthru
      _
    // Predicated region
    $region22: #{tpu_custom_call.1} parent=1 // pred_check
      _
    $region23: #{tpu_custom_call.1} parent=1 // pred_check_branch
      %52 = sbr.rel (0) target = $region25
    $region24: #{tpu_custom_call.1} parent=1 // pred_region
      %53 = dma.done [#allocation6], 8192
    $region25: #{tpu_custom_call.1} parent=1 // pred_fallthru
      _
    // Predicated region
    $region26: #{tpu_custom_call.1} parent=1 // pred_check
      _
    $region27: #{tpu_custom_call.1} parent=1 // pred_check_branch
      %55 = sbr.rel (0) target = $region29
    $region28: #{tpu_custom_call.1} parent=1 // pred_region
      %56 = dma.done [#allocation6], 8192
    $region29: #{tpu_custom_call.1} parent=1 // pred_fallthru
      _
    %v57 = vld [vmem:[#allocation2] sm:$0xff]
    %v58 = vlaneseq
    %v59 = vand.u32 %v58, 127
    %60 = vset.pattern.permute.xlu0 0
    %61 = vperm.xlu0 %60, %v57
    %v62 = vpop.permute.xlu0 %61
    %vm63 = vcmp.eq.s32.totalorder %v59, %v62
    %v64 = vsel %vm63, 1, 0
    %65 = vset.pattern.permute.xlu0 1
    %66 = vperm.xlu0 %65, %v57
    %v67 = vpop.permute.xlu0 %66
    %vm68 = vcmp.eq.s32.totalorder %v59, %v67
    %v69 = vsel %vm68, 1, 0
    %v70 = vadd.s32 %v64, %v69
    %71 = vset.pattern.permute.xlu0 2
    %72 = vperm.xlu0 %71, %v57
    %v73 = vpop.permute.xlu0 %72
    %vm74 = vcmp.eq.s32.totalorder %v59, %v73
    %v75 = vsel %vm74, 1, 0
    %v76 = vadd.s32 %v70, %v75
    %77 = vset.pattern.permute.xlu0 3
    %78 = vperm.xlu0 %77, %v57
    %v79 = vpop.permute.xlu0 %78
    %vm80 = vcmp.eq.s32.totalorder %v59, %v79
    %v81 = vsel %vm80, 1, 0
    %v82 = vadd.s32 %v76, %v81
    %83 = vset.pattern.permute.xlu0 4
    %84 = vperm.xlu0 %83, %v57
    %v85 = vpop.permute.xlu0 %84
    %vm86 = vcmp.eq.s32.totalorder %v59, %v85
    %v87 = vsel %vm86, 1, 0
    %v88 = vadd.s32 %v82, %v87
    %89 = vset.pattern.permute.xlu0 5
    %90 = vperm.xlu0 %89, %v57
    %v91 = vpop.permute.xlu0 %90
    %vm92 = vcmp.eq.s32.totalorder %v59, %v91
    %v93 = vsel %vm92, 1, 0
    %v94 = vadd.s32 %v88, %v93
    %95 = vset.pattern.permute.xlu0 6
    %96 = vperm.xlu0 %95, %v57
    %v97 = vpop.permute.xlu0 %96
    %vm98 = vcmp.eq.s32.totalorder %v59, %v97
    %v99 = vsel %vm98, 1, 0
    %v100 = vadd.s32 %v94, %v99
    %101 = vset.pattern.permute.xlu0 7
    %102 = vperm.xlu0 %101, %v57
    %v103 = vpop.permute.xlu0 %102
    %vm104 = vcmp.eq.s32.totalorder %v59, %v103
    %v105 = vsel %vm104, 1, 0
    %v106 = vadd.s32 %v100, %v105
    %107 = vset.pattern.permute.xlu0 8
    %108 = vperm.xlu0 %107, %v57
    %v109 = vpop.permute.xlu0 %108
    %vm110 = vcmp.eq.s32.totalorder %v59, %v109
    %v111 = vsel %vm110, 1, 0
    %v112 = vadd.s32 %v106, %v111
    %113 = vset.pattern.permute.xlu0 9
    %114 = vperm.xlu0 %113, %v57
    %v115 = vpop.permute.xlu0 %114
    %vm116 = vcmp.eq.s32.totalorder %v59, %v115
    %v117 = vsel %vm116, 1, 0
    %v118 = vadd.s32 %v112, %v117
    %119 = vset.pattern.permute.xlu0 10
    %120 = vperm.xlu0 %119, %v57
    %v121 = vpop.permute.xlu0 %120
    %vm122 = vcmp.eq.s32.totalorder %v59, %v121
    %v123 = vsel %vm122, 1, 0
    %v124 = vadd.s32 %v118, %v123
    %125 = vset.pattern.permute.xlu0 11
    %126 = vperm.xlu0 %125, %v57
    %v127 = vpop.permute.xlu0 %126
    %vm128 = vcmp.eq.s32.totalorder %v59, %v127
    %v129 = vsel %vm128, 1, 0
    %v130 = vadd.s32 %v124, %v129
    %131 = vset.pattern.permute.xlu0 12
    %132 = vperm.xlu0 %131, %v57
    %v133 = vpop.permute.xlu0 %132
    %vm134 = vcmp.eq.s32.totalorder %v59, %v133
    %v135 = vsel %vm134, 1, 0
    %v136 = vadd.s32 %v130, %v135
    %137 = vset.pattern.permute.xlu0 13
    %138 = vperm.xlu0 %137, %v57
    %v139 = vpop.permute.xlu0 %138
    %vm140 = vcmp.eq.s32.totalorder %v59, %v139
    %v141 = vsel %vm140, 1, 0
    %v142 = vadd.s32 %v136, %v141
    %143 = vset.pattern.permute.xlu0 14
    %144 = vperm.xlu0 %143, %v57
    %v145 = vpop.permute.xlu0 %144
    %vm146 = vcmp.eq.s32.totalorder %v59, %v145
    %v147 = vsel %vm146, 1, 0
    %v148 = vadd.s32 %v142, %v147
    %149 = vset.pattern.permute.xlu0 15
    %150 = vperm.xlu0 %149, %v57
    %v151 = vpop.permute.xlu0 %150
    %vm152 = vcmp.eq.s32.totalorder %v59, %v151
    %v153 = vsel %vm152, 1, 0
    %v154 = vadd.s32 %v148, %v153
    %v155 = vcvt.s32.f32 %v154
    %v156 = vmul.f32 %v155, 0.0625
    %v157 = vld [vmem:[#allocation5] sm:$0xff]
    %v158 = vld [vmem:[#allocation5 + $0x8] sm:$0xff]
    %v159 = vld [vmem:[#allocation5 + $0x10] sm:$0xff]
    %v160 = vld [vmem:[#allocation5 + $0x18] sm:$0xff]
    %v161 = vld [vmem:[#allocation5 + $0x20] sm:$0xff]
    %v162 = vld [vmem:[#allocation5 + $0x28] sm:$0xff]
    %v163 = vld [vmem:[#allocation5 + $0x30] sm:$0xff]
    %v164 = vld [vmem:[#allocation5 + $0x38] sm:$0xff]
    %v165 = vld [vmem:[#allocation5 + $0x40] sm:$0xff]
    %v166 = vld [vmem:[#allocation5 + $0x48] sm:$0xff]
    %v167 = vld [vmem:[#allocation5 + $0x50] sm:$0xff]
    %v168 = vld [vmem:[#allocation5 + $0x58] sm:$0xff]
    %v169 = vld [vmem:[#allocation5 + $0x60] sm:$0xff]
    %v170 = vld [vmem:[#allocation5 + $0x68] sm:$0xff]
    %v171 = vld [vmem:[#allocation5 + $0x70] sm:$0xff]
    %v172 = vld [vmem:[#allocation5 + $0x78] sm:$0xff]
    %v173 = vld [vmem:[#allocation5 + $0x80] sm:$0xff]
    %v174 = vld [vmem:[#allocation5 + $0x88] sm:$0xff]
    %v175 = vld [vmem:[#allocation5 + $0x90] sm:$0xff]
    %v176 = vld [vmem:[#allocation5 + $0x98] sm:$0xff]
    %v177 = vld [vmem:[#allocation5 + $0xa0] sm:$0xff]
    %v178 = vld [vmem:[#allocation5 + $0xa8] sm:$0xff]
    %v179 = vld [vmem:[#allocation5 + $0xb0] sm:$0xff]
    %v180 = vld [vmem:[#allocation5 + $0xb8] sm:$0xff]
    %v181 = vld [vmem:[#allocation5 + $0xc0] sm:$0xff]
    %v182 = vld [vmem:[#allocation5 + $0xc8] sm:$0xff]
    %v183 = vld [vmem:[#allocation5 + $0xd0] sm:$0xff]
    %v184 = vld [vmem:[#allocation5 + $0xd8] sm:$0xff]
    %v185 = vld [vmem:[#allocation5 + $0xe0] sm:$0xff]
    %v186 = vld [vmem:[#allocation5 + $0xe8] sm:$0xff]
    %v187 = vld [vmem:[#allocation5 + $0xf0] sm:$0xff]
    %v188 = vld [vmem:[#allocation5 + $0xf8] sm:$0xff]
    %v189 = vld [vmem:[#allocation5 + $0x100] sm:$0xff]
    %v190 = vld [vmem:[#allocation5 + $0x108] sm:$0xff]
    %v191 = vld [vmem:[#allocation5 + $0x110] sm:$0xff]
    %v192 = vld [vmem:[#allocation5 + $0x118] sm:$0xff]
    %v193 = vld [vmem:[#allocation5 + $0x120] sm:$0xff]
    %v194 = vld [vmem:[#allocation5 + $0x128] sm:$0xff]
    %v195 = vld [vmem:[#allocation5 + $0x130] sm:$0xff]
    %v196 = vld [vmem:[#allocation5 + $0x138] sm:$0xff]
    %v197 = vld [vmem:[#allocation5 + $0x140] sm:$0xff]
    %v198 = vld [vmem:[#allocation5 + $0x148] sm:$0xff]
    %v199 = vld [vmem:[#allocation5 + $0x150] sm:$0xff]
    %v200 = vld [vmem:[#allocation5 + $0x158] sm:$0xff]
    %v201 = vld [vmem:[#allocation5 + $0x160] sm:$0xff]
    %v202 = vld [vmem:[#allocation5 + $0x168] sm:$0xff]
    %v203 = vld [vmem:[#allocation5 + $0x170] sm:$0xff]
    %v204 = vld [vmem:[#allocation5 + $0x178] sm:$0xff]
    %v205 = vld [vmem:[#allocation5 + $0x180] sm:$0xff]
    %v206 = vld [vmem:[#allocation5 + $0x188] sm:$0xff]
    %v207 = vld [vmem:[#allocation5 + $0x190] sm:$0xff]
    %v208 = vld [vmem:[#allocation5 + $0x198] sm:$0xff]
    %v209 = vld [vmem:[#allocation5 + $0x1a0] sm:$0xff]
    %v210 = vld [vmem:[#allocation5 + $0x1a8] sm:$0xff]
    %v211 = vld [vmem:[#allocation5 + $0x1b0] sm:$0xff]
    %v212 = vld [vmem:[#allocation5 + $0x1b8] sm:$0xff]
    %v213 = vld [vmem:[#allocation5 + $0x1c0] sm:$0xff]
    %v214 = vld [vmem:[#allocation5 + $0x1c8] sm:$0xff]
    %v215 = vld [vmem:[#allocation5 + $0x1d0] sm:$0xff]
    %v216 = vld [vmem:[#allocation5 + $0x1d8] sm:$0xff]
    %v217 = vld [vmem:[#allocation5 + $0x1e0] sm:$0xff]
    %v218 = vld [vmem:[#allocation5 + $0x1e8] sm:$0xff]
    %v219 = vld [vmem:[#allocation5 + $0x1f0] sm:$0xff]
    %v220 = vld [vmem:[#allocation5 + $0x1f8] sm:$0xff]
    %221 = vmatprep.subr.mxu0 %v158
    %222 = vmatpush1.msra.mxu0 %v157
    %223 = vmatprep.subr.mxu0 %v162
    %224 = vmatpush1.msra.mxu0 %v161
    %225 = vmatprep.subr.mxu0 %v166
    %226 = vmatpush1.msra.mxu0 %v165
    %227 = vmatprep.subr.mxu0 %v170
    %228 = vmatpush1.msra.mxu0 %v169
    %229 = vmatprep.subr.mxu0 %v174
    %230 = vmatpush1.msra.mxu0 %v173
    %231 = vmatprep.subr.mxu0 %v178
    %232 = vmatpush1.msra.mxu0 %v177
    %233 = vmatprep.subr.mxu0 %v182
    %234 = vmatpush1.msra.mxu0 %v181
    %235 = vmatprep.subr.mxu0 %v186
    %236 = vmatpush1.msra.mxu0 %v185
    %237 = vmatprep.subr.mxu0 %v190
    %238 = vmatpush1.msra.mxu0 %v189
    %239 = vmatprep.subr.mxu0 %v194
    %240 = vmatpush1.msra.mxu0 %v193
    %241 = vmatprep.subr.mxu0 %v198
    %242 = vmatpush1.msra.mxu0 %v197
    %243 = vmatprep.subr.mxu0 %v202
    %244 = vmatpush1.msra.mxu0 %v201
    %245 = vmatprep.subr.mxu0 %v206
    %246 = vmatpush1.msra.mxu0 %v205
    %247 = vmatprep.subr.mxu0 %v210
    %248 = vmatpush1.msra.mxu0 %v209
    %249 = vmatprep.subr.mxu0 %v214
    %250 = vmatpush1.msra.mxu0 %v213
    %251 = vmatprep.subr.mxu0 %v218
    %252 = vmatpush1.msra.mxu0 %v217
    %253 = vmatprep.subr.mxu0 0.0
    %254 = vmatpush1.msra.mxu0 0.0
    %255 = vmatprep.subr.mxu0 0.0
    %256 = vmatpush1.msra.mxu0 0.0
    %257 = vmatprep.subr.mxu0 0.0
    %258 = vmatpush1.msra.mxu0 0.0
    %259 = vmatprep.subr.mxu0 0.0
    %260 = vmatpush1.msra.mxu0 0.0
    %261 = vmatprep.subr.mxu0 0.0
    %262 = vmatpush1.msra.mxu0 0.0
    %263 = vmatprep.subr.mxu0 0.0
    %264 = vmatpush1.msra.mxu0 0.0
    %265 = vmatprep.subr.mxu0 0.0
    %266 = vmatpush1.msra.mxu0 0.0
    %267 = vmatprep.subr.mxu0 0.0
    %268 = vmatpush1.msra.mxu0 0.0
    %269 = vmatprep.subr.mxu0 0.0
    %270 = vmatpush1.msra.mxu0 0.0
    %271 = vmatprep.subr.mxu0 0.0
    %272 = vmatpush1.msra.mxu0 0.0
    %273 = vmatprep.subr.mxu0 0.0
    %274 = vmatpush1.msra.mxu0 0.0
    %275 = vmatprep.subr.mxu0 0.0
    %276 = vmatpush1.msra.mxu0 0.0
    %277 = vmatprep.subr.mxu0 0.0
    %278 = vmatpush1.msra.mxu0 0.0
    %279 = vmatprep.subr.mxu0 0.0
    %280 = vmatpush1.msra.mxu0 0.0
    %281 = vmatprep.subr.mxu0 0.0
    %282 = vmatpush1.msra.mxu0 0.0
    %283 = vmatprep.subr.mxu0 0.0
    %284 = vmatpush1.msra.mxu0 0.0
    %285 = vmatprep.mubr.f32.mxu0 0.0
    %286 = vmatmul.mubr.f32.gmra.mrb[0].mxu0 %v156
    %v287 = vpop.f32.mrb[0].mxu0
    %v288 = vadd.f32 0.0, %v287
    %v289 = vpop.f32.mrb[0].mxu0
    %v290 = vadd.f32 0.0, %v289
    %291 = vdwg.mxu0
    %292 = vmatprep.subr.mxu0 %v160
    %293 = vmatpush1.msra.mxu0 %v159
    %294 = vmatprep.subr.mxu0 %v164
    %295 = vmatpush1.msra.mxu0 %v163
    %296 = vmatprep.subr.mxu0 %v168
    %297 = vmatpush1.msra.mxu0 %v167
    %298 = vmatprep.subr.mxu0 %v172
    %299 = vmatpush1.msra.mxu0 %v171
    %300 = vmatprep.subr.mxu0 %v176
    %301 = vmatpush1.msra.mxu0 %v175
    %302 = vmatprep.subr.mxu0 %v180
    %303 = vmatpush1.msra.mxu0 %v179
    %304 = vmatprep.subr.mxu0 %v184
    %305 = vmatpush1.msra.mxu0 %v183
    %306 = vmatprep.subr.mxu0 %v188
    %307 = vmatpush1.msra.mxu0 %v187
    %308 = vmatprep.subr.mxu0 %v192
    %309 = vmatpush1.msra.mxu0 %v191
    %310 = vmatprep.subr.mxu0 %v196
    %311 = vmatpush1.msra.mxu0 %v195
    %312 = vmatprep.subr.mxu0 %v200
    %313 = vmatpush1.msra.mxu0 %v199
    %314 = vmatprep.subr.mxu0 %v204
    %315 = vmatpush1.msra.mxu0 %v203
    %316 = vmatprep.subr.mxu0 %v208
    %317 = vmatpush1.msra.mxu0 %v207
    %318 = vmatprep.subr.mxu0 %v212
    %319 = vmatpush1.msra.mxu0 %v211
    %320 = vmatprep.subr.mxu0 %v216
    %321 = vmatpush1.msra.mxu0 %v215
    %322 = vmatprep.subr.mxu0 %v220
    %323 = vmatpush1.msra.mxu0 %v219
    %324 = vmatprep.subr.mxu0 0.0
    %325 = vmatpush1.msra.mxu0 0.0
    %326 = vmatprep.subr.mxu0 0.0
    %327 = vmatpush1.msra.mxu0 0.0
    %328 = vmatprep.subr.mxu0 0.0
    %329 = vmatpush1.msra.mxu0 0.0
    %330 = vmatprep.subr.mxu0 0.0
    %331 = vmatpush1.msra.mxu0 0.0
    %332 = vmatprep.subr.mxu0 0.0
    %333 = vmatpush1.msra.mxu0 0.0
    %334 = vmatprep.subr.mxu0 0.0
    %335 = vmatpush1.msra.mxu0 0.0
    %336 = vmatprep.subr.mxu0 0.0
    %337 = vmatpush1.msra.mxu0 0.0
    %338 = vmatprep.subr.mxu0 0.0
    %339 = vmatpush1.msra.mxu0 0.0
    %340 = vmatprep.subr.mxu0 0.0
    %341 = vmatpush1.msra.mxu0 0.0
    %342 = vmatprep.subr.mxu0 0.0
    %343 = vmatpush1.msra.mxu0 0.0
    %344 = vmatprep.subr.mxu0 0.0
    %345 = vmatpush1.msra.mxu0 0.0
    %346 = vmatprep.subr.mxu0 0.0
    %347 = vmatpush1.msra.mxu0 0.0
    %348 = vmatprep.subr.mxu0 0.0
    %349 = vmatpush1.msra.mxu0 0.0
    %350 = vmatprep.subr.mxu0 0.0
    %351 = vmatpush1.msra.mxu0 0.0
    %352 = vmatprep.subr.mxu0 0.0
    %353 = vmatpush1.msra.mxu0 0.0
    %354 = vmatprep.subr.mxu0 0.0
    %355 = vmatpush1.msra.mxu0 0.0
    %356 = vmatprep.mubr.f32.mxu0 0.0
    %357 = vmatmul.mubr.f32.gmra.mrb[0].mxu0 %v156
    %v358 = vpop.f32.mrb[0].mxu0
    %v359 = vadd.f32 0.0, %v358
    %v360 = vpop.f32.mrb[0].mxu0
    %v361 = vadd.f32 0.0, %v360
    %362 = vdwg.mxu0
    %v363 = vld [vmem:[#allocation7] sm:$0xff]
    %v364 = vld [vmem:[#allocation7 + $0x8] sm:$0xff]
    %v365 = vld [vmem:[#allocation7 + $0x10] sm:$0xff]
    %v366 = vld [vmem:[#allocation7 + $0x18] sm:$0xff]
    %v367 = vld [vmem:[#allocation7 + $0x20] sm:$0xff]
    %v368 = vld [vmem:[#allocation7 + $0x28] sm:$0xff]
    %v369 = vld [vmem:[#allocation7 + $0x30] sm:$0xff]
    %v370 = vld [vmem:[#allocation7 + $0x38] sm:$0xff]
    %v371 = vld [vmem:[#allocation7 + $0x40] sm:$0xff]
    %v372 = vld [vmem:[#allocation7 + $0x48] sm:$0xff]
    %v373 = vld [vmem:[#allocation7 + $0x50] sm:$0xff]
    %v374 = vld [vmem:[#allocation7 + $0x58] sm:$0xff]
    %v375 = vld [vmem:[#allocation7 + $0x60] sm:$0xff]
    %v376 = vld [vmem:[#allocation7 + $0x68] sm:$0xff]
    %v377 = vld [vmem:[#allocation7 + $0x70] sm:$0xff]
    %v378 = vld [vmem:[#allocation7 + $0x78] sm:$0xff]
    %v379 = vld [vmem:[#allocation7 + $0x80] sm:$0xff]
    %v380 = vld [vmem:[#allocation7 + $0x88] sm:$0xff]
    %v381 = vld [vmem:[#allocation7 + $0x90] sm:$0xff]
    %v382 = vld [vmem:[#allocation7 + $0x98] sm:$0xff]
    %v383 = vld [vmem:[#allocation7 + $0xa0] sm:$0xff]
    %v384 = vld [vmem:[#allocation7 + $0xa8] sm:$0xff]
    %v385 = vld [vmem:[#allocation7 + $0xb0] sm:$0xff]
    %v386 = vld [vmem:[#allocation7 + $0xb8] sm:$0xff]
    %v387 = vld [vmem:[#allocation7 + $0xc0] sm:$0xff]
    %v388 = vld [vmem:[#allocation7 + $0xc8] sm:$0xff]
    %v389 = vld [vmem:[#allocation7 + $0xd0] sm:$0xff]
    %v390 = vld [vmem:[#allocation7 + $0xd8] sm:$0xff]
    %v391 = vld [vmem:[#allocation7 + $0xe0] sm:$0xff]
    %v392 = vld [vmem:[#allocation7 + $0xe8] sm:$0xff]
    %v393 = vld [vmem:[#allocation7 + $0xf0] sm:$0xff]
    %v394 = vld [vmem:[#allocation7 + $0xf8] sm:$0xff]
    %v395 = vld [vmem:[#allocation7 + $0x100] sm:$0xff]
    %v396 = vld [vmem:[#allocation7 + $0x108] sm:$0xff]
    %v397 = vld [vmem:[#allocation7 + $0x110] sm:$0xff]
    %v398 = vld [vmem:[#allocation7 + $0x118] sm:$0xff]
    %v399 = vld [vmem:[#allocation7 + $0x120] sm:$0xff]
    %v400 = vld [vmem:[#allocation7 + $0x128] sm:$0xff]
    %v401 = vld [vmem:[#allocation7 + $0x130] sm:$0xff]
    %v402 = vld [vmem:[#allocation7 + $0x138] sm:$0xff]
    %v403 = vld [vmem:[#allocation7 + $0x140] sm:$0xff]
    %v404 = vld [vmem:[#allocation7 + $0x148] sm:$0xff]
    %v405 = vld [vmem:[#allocation7 + $0x150] sm:$0xff]
    %v406 = vld [vmem:[#allocation7 + $0x158] sm:$0xff]
    %v407 = vld [vmem:[#allocation7 + $0x160] sm:$0xff]
    %v408 = vld [vmem:[#allocation7 + $0x168] sm:$0xff]
    %v409 = vld [vmem:[#allocation7 + $0x170] sm:$0xff]
    %v410 = vld [vmem:[#allocation7 + $0x178] sm:$0xff]
    %v411 = vld [vmem:[#allocation7 + $0x180] sm:$0xff]
    %v412 = vld [vmem:[#allocation7 + $0x188] sm:$0xff]
    %v413 = vld [vmem:[#allocation7 + $0x190] sm:$0xff]
    %v414 = vld [vmem:[#allocation7 + $0x198] sm:$0xff]
    %v415 = vld [vmem:[#allocation7 + $0x1a0] sm:$0xff]
    %v416 = vld [vmem:[#allocation7 + $0x1a8] sm:$0xff]
    %v417 = vld [vmem:[#allocation7 + $0x1b0] sm:$0xff]
    %v418 = vld [vmem:[#allocation7 + $0x1b8] sm:$0xff]
    %v419 = vld [vmem:[#allocation7 + $0x1c0] sm:$0xff]
    %v420 = vld [vmem:[#allocation7 + $0x1c8] sm:$0xff]
    %v421 = vld [vmem:[#allocation7 + $0x1d0] sm:$0xff]
    %v422 = vld [vmem:[#allocation7 + $0x1d8] sm:$0xff]
    %v423 = vld [vmem:[#allocation7 + $0x1e0] sm:$0xff]
    %v424 = vld [vmem:[#allocation7 + $0x1e8] sm:$0xff]
    %v425 = vld [vmem:[#allocation7 + $0x1f0] sm:$0xff]
    %v426 = vld [vmem:[#allocation7 + $0x1f8] sm:$0xff]
    %v427 = vld [vmem:[%s3] sm:$0x1]
    %v429 = vlaneseq
    %v430 = vshrl.u32 %v429, 7
    %v431 = vsub.s32 0, %v430
    %v432 = vrot.slane %v427, %v431
    %434 = vmatprep.subr.mxu0 0.0
    %435 = vmatpush1.msra.mxu0 %v363
    %436 = vmatprep.subr.mxu0 0.0
    %437 = vmatpush1.msra.mxu0 %v364
    %438 = vmatprep.subr.mxu0 0.0
    %439 = vmatpush1.msra.mxu0 %v365
    %440 = vmatprep.subr.mxu0 0.0
    %441 = vmatpush1.msra.mxu0 %v366
    %442 = vmatprep.subr.mxu0 0.0
    %443 = vmatpush1.msra.mxu0 %v367
    %444 = vmatprep.subr.mxu0 0.0
    %445 = vmatpush1.msra.mxu0 %v368
    %446 = vmatprep.subr.mxu0 0.0
    %447 = vmatpush1.msra.mxu0 %v369
    %448 = vmatprep.subr.mxu0 0.0
    %449 = vmatpush1.msra.mxu0 %v370
    %450 = vmatprep.subr.mxu0 0.0
    %451 = vmatpush1.msra.mxu0 %v371
    %452 = vmatprep.subr.mxu0 0.0
    %453 = vmatpush1.msra.mxu0 %v372
    %454 = vmatprep.subr.mxu0 0.0
    %455 = vmatpush1.msra.mxu0 %v373
    %456 = vmatprep.subr.mxu0 0.0
    %457 = vmatpush1.msra.mxu0 %v374
    %458 = vmatprep.subr.mxu0 0.0
    %459 = vmatpush1.msra.mxu0 %v375
    %460 = vmatprep.subr.mxu0 0.0
    %461 = vmatpush1.msra.mxu0 %v376
    %462 = vmatprep.subr.mxu0 0.0
    %463 = vmatpush1.msra.mxu0 %v377
    %464 = vmatprep.subr.mxu0 0.0
    %465 = vmatpush1.msra.mxu0 %v378
    %466 = vmatprep.subr.mxu0 0.0
    %467 = vmatpush1.msra.mxu0 %v379
    %468 = vmatprep.subr.mxu0 0.0
    %469 = vmatpush1.msra.mxu0 %v380
    %470 = vmatprep.subr.mxu0 0.0
    %471 = vmatpush1.msra.mxu0 %v381
    %472 = vmatprep.subr.mxu0 0.0
    %473 = vmatpush1.msra.mxu0 %v382
    %474 = vmatprep.subr.mxu0 0.0
    %475 = vmatpush1.msra.mxu0 %v383
    %476 = vmatprep.subr.mxu0 0.0
    %477 = vmatpush1.msra.mxu0 %v384
    %478 = vmatprep.subr.mxu0 0.0
    %479 = vmatpush1.msra.mxu0 %v385
    %480 = vmatprep.subr.mxu0 0.0
    %481 = vmatpush1.msra.mxu0 %v386
    %482 = vmatprep.subr.mxu0 0.0
    %483 = vmatpush1.msra.mxu0 %v387
    %484 = vmatprep.subr.mxu0 0.0
    %485 = vmatpush1.msra.mxu0 %v388
    %486 = vmatprep.subr.mxu0 0.0
    %487 = vmatpush1.msra.mxu0 %v389
    %488 = vmatprep.subr.mxu0 0.0
    %489 = vmatpush1.msra.mxu0 %v390
    %490 = vmatprep.subr.mxu0 0.0
    %491 = vmatpush1.msra.mxu0 %v391
    %492 = vmatprep.subr.mxu0 0.0
    %493 = vmatpush1.msra.mxu0 %v392
    %494 = vmatprep.subr.mxu0 0.0
    %495 = vmatpush1.msra.mxu0 %v393
    %496 = vmatprep.subr.mxu0 0.0
    %497 = vmatpush1.msra.mxu0 %v394
    %498 = vmatprep.mubr.f32.mxu0 %v290
    %499 = vmatmul.mubr.f32.gmra.mrb[0].mxu0 %v288
    %v500 = vpop.f32.mrb[0].mxu0
    %v501 = vadd.f32 %v432, %v500
    %v502 = vpop.f32.mrb[0].mxu0
    %503 = vdwg.mxu0
    %504 = vmatprep.subr.mxu0 0.0
    %505 = vmatpush1.msra.mxu0 %v395
    %506 = vmatprep.subr.mxu0 0.0
    %507 = vmatpush1.msra.mxu0 %v396
    %508 = vmatprep.subr.mxu0 0.0
    %509 = vmatpush1.msra.mxu0 %v397
    %510 = vmatprep.subr.mxu0 0.0
    %511 = vmatpush1.msra.mxu0 %v398
    %512 = vmatprep.subr.mxu0 0.0
    %513 = vmatpush1.msra.mxu0 %v399
    %514 = vmatprep.subr.mxu0 0.0
    %515 = vmatpush1.msra.mxu0 %v400
    %516 = vmatprep.subr.mxu0 0.0
    %517 = vmatpush1.msra.mxu0 %v401
    %518 = vmatprep.subr.mxu0 0.0
    %519 = vmatpush1.msra.mxu0 %v402
    %520 = vmatprep.subr.mxu0 0.0
    %521 = vmatpush1.msra.mxu0 %v403
    %522 = vmatprep.subr.mxu0 0.0
    %523 = vmatpush1.msra.mxu0 %v404
    %524 = vmatprep.subr.mxu0 0.0
    %525 = vmatpush1.msra.mxu0 %v405
    %526 = vmatprep.subr.mxu0 0.0
    %527 = vmatpush1.msra.mxu0 %v406
    %528 = vmatprep.subr.mxu0 0.0
    %529 = vmatpush1.msra.mxu0 %v407
    %530 = vmatprep.subr.mxu0 0.0
    %531 = vmatpush1.msra.mxu0 %v408
    %532 = vmatprep.subr.mxu0 0.0
    %533 = vmatpush1.msra.mxu0 %v409
    %534 = vmatprep.subr.mxu0 0.0
    %535 = vmatpush1.msra.mxu0 %v410
    %536 = vmatprep.subr.mxu0 0.0
    %537 = vmatpush1.msra.mxu0 %v411
    %538 = vmatprep.subr.mxu0 0.0
    %539 = vmatpush1.msra.mxu0 %v412
    %540 = vmatprep.subr.mxu0 0.0
    %541 = vmatpush1.msra.mxu0 %v413
    %542 = vmatprep.subr.mxu0 0.0
    %543 = vmatpush1.msra.mxu0 %v414
    %544 = vmatprep.subr.mxu0 0.0
    %545 = vmatpush1.msra.mxu0 %v415
    %546 = vmatprep.subr.mxu0 0.0
    %547 = vmatpush1.msra.mxu0 %v416
    %548 = vmatprep.subr.mxu0 0.0
    %549 = vmatpush1.msra.mxu0 %v417
    %550 = vmatprep.subr.mxu0 0.0
    %551 = vmatpush1.msra.mxu0 %v418
    %552 = vmatprep.subr.mxu0 0.0
    %553 = vmatpush1.msra.mxu0 %v419
    %554 = vmatprep.subr.mxu0 0.0
    %555 = vmatpush1.msra.mxu0 %v420
    %556 = vmatprep.subr.mxu0 0.0
    %557 = vmatpush1.msra.mxu0 %v421
    %558 = vmatprep.subr.mxu0 0.0
    %559 = vmatpush1.msra.mxu0 %v422
    %560 = vmatprep.subr.mxu0 0.0
    %561 = vmatpush1.msra.mxu0 %v423
    %562 = vmatprep.subr.mxu0 0.0
    %563 = vmatpush1.msra.mxu0 %v424
    %564 = vmatprep.subr.mxu0 0.0
    %565 = vmatpush1.msra.mxu0 %v425
    %566 = vmatprep.subr.mxu0 0.0
    %567 = vmatpush1.msra.mxu0 %v426
    %568 = vmatprep.mubr.f32.mxu0 %v361
    %569 = vmatmul.mubr.f32.gmra.mrb[0].mxu0 %v359
    %v570 = vpop.f32.mrb[0].mxu0
    %v571 = vadd.f32 %v501, %v570
    %v572 = vpop.f32.mrb[0].mxu0
    %573 = vdwg.mxu0
    %574 = vst [vmem:[#allocation8] sm:$0xff] %v571
    // Predicated region
    $region30: #{tpu_custom_call.1} parent=1 // pred_check
      _
    $region31: #{tpu_custom_call.1} parent=1 // pred_check_branch
      %576 = sbr.rel (0) target = $region33
    $region32: #{tpu_custom_call.1} parent=1 // pred_region
      %s578 = ssub.s32 128, 128
      %579 = vsyncadd [#allocation4], %s578
      %s581 = sshll.u32 [#allocation8], 4
      %s582 = int_to_ptr.vmem [resolvable:$true] %s581
      %584 = dma.vmem_to_hbm [thread:$0]  %s582, 128, %s4, [#allocation4]
    $region33: #{tpu_custom_call.1} parent=1 // pred_fallthru
      _
    // Predicated region
    $region34: #{tpu_custom_call.1} parent=1 // pred_check
      _
    $region35: #{tpu_custom_call.1} parent=1 // pred_check_branch
      %586 = sbr.rel (0) target = $region37
    $region36: #{tpu_custom_call.1} parent=1 // pred_region
      %587 = dma.done [#allocation4], 128
    $region37: #{tpu_custom_call.1} parent=1 // pred_fallthru
      _
    %588 = vsyncpa [#allocation3], 1
    %589 = vsyncpa [#allocation6], 1
    %590 = vsyncpa [#allocation4], 1

</llo_original>
